<compile_context>
chip_gen: v6e
topology: v6e:2x2x1
jax: 0.10.0
libtpu: 0.0.40
codegen_flags: <defaults>
</compile_context>

<pallas_src>
import jax
import jax.numpy as jnp
from jax.experimental import pallas as pl
from jax.experimental.pallas import tpu as pltpu


# ------------------------------ helpers -------------------------------------

def _round_up(x, m):
    return (x + m - 1) // m * m


_VMEM_CFG = None


def _vmem_budget_and_limit():
    """Returns (tile-sizing budget, scoped-VMEM limit to request), per generation.
    v7x: 64 MiB physical -> request 48 MiB, size tiles against ~38 MiB.
    v5e/v6e: 128 MiB physical -> request 96 MiB (v5e's *default* scoped limit is
    only 16 MiB, so requesting it explicitly matters), size against ~76 MiB."""
    global _VMEM_CFG
    if _VMEM_CFG is None:
        cap = 64 * 1024 * 1024                      # conservative default (= v7x)
        try:
            info_fn = getattr(pltpu, "get_tpu_info", None)
            if info_fn is not None:
                cap = int(info_fn().vmem_capacity_bytes)
        except Exception:
            pass
        limit = int(min((3 * cap) // 4, 96 * 1024 * 1024))
        budget = (4 * limit) // 5
        _VMEM_CFG = (budget, limit)
    return _VMEM_CFG


def _pick_row_tile(m_rows, per_row_bytes, resident_bytes, budget_bytes,
                   tm_max=2048):
    """Largest row tile (multiple of 16 where possible, of 8 always, <= tm_max)
    such that double-buffered streamed tiles + resident weights fit the budget,
    while keeping >=2 row-grid steps so v7x's two TensorCores can split the axis."""
    avail = max(budget_bytes - resident_bytes, 8 * per_row_bytes)
    tm = min(tm_max, max(8, avail // per_row_bytes))
    tm = max(8, (tm // 16) * 16)                    # bf16 sublane packing
    if m_rows > 16:                                 # >=2 grid steps (v7x megacore)
        tm = min(tm, max(16, _round_up(-(-m_rows // 2), 8)))
    tm = min(tm, _round_up(m_rows, 8))              # never exceed the row extent
    return max(8, (tm // 8) * 8)


# ----------------------------- Pallas kernels -------------------------------

def _row_matmul_bias_kernel(x_ref, w_ref, b_ref, o_ref):
    # f32 rows streamed from HBM; cast to bf16 on-chip right before the MXU
    # (VPU cast is free in a mem-bound kernel).  f32 accumulation + f32 bias add.
    x = x_ref[...].astype(jnp.bfloat16)
    acc = jnp.dot(x, w_ref[...], preferred_element_type=jnp.float32)
    o_ref[...] = acc + b_ref[...]


def _fc_resident_kernel(x_ref, w1_ref, b1_ref, w2_ref, b2_ref, o_ref):
    # Both weight matrices resident in VMEM; two bf16 MXU matmuls with f32
    # accumulation; LeakyReLU(0.01) epilogue in f32 (v5e VPU has no bf16 path).
    x = x_ref[...].astype(jnp.bfloat16)
    h = jnp.dot(x, w1_ref[...], preferred_element_type=jnp.float32) + b1_ref[...]
    h = jnp.where(h > 0, h, 0.01 * h)
    o_ref[...] = (jnp.dot(h.astype(jnp.bfloat16), w2_ref[...],
                          preferred_element_type=jnp.float32) + b2_ref[...])


def _fc_ktiled_kernel(x_ref, w1_ref, b1_ref, w2_ref, b2_ref, o_ref, acc_ref):
    # Large in_f: first matmul is K-tiled (reduction axis is the last grid axis);
    # f32 accumulator lives in scratch, second matmul runs only on the last step.
    k = pl.program_id(1)

    @pl.when(k == 0)
    def _():
        acc_ref[...] = jnp.zeros_like(acc_ref)

    acc_ref[...] += jnp.dot(x_ref[...].astype(jnp.bfloat16), w1_ref[...],
                            preferred_element_type=jnp.float32)

    @pl.when(k == pl.num_programs(1) - 1)
    def _():
        h = acc_ref[...] + b1_ref[...]
        h = jnp.where(h > 0, h, 0.01 * h)
        o_ref[...] = (jnp.dot(h.astype(jnp.bfloat16), w2_ref[...],
                              preferred_element_type=jnp.float32) + b2_ref[...])


# ------------------------------ wrappers -------------------------------------

def oct_matmul(x, w_pad, b_pad, *, n_out):
    """x: (M, K) f32 activations (streamed; bf16 cast happens in-kernel);
    w_pad: (K, Np) bf16 with Np lane-dense; b_pad: (1, Np) f32.
    Returns (M, n_out) f32."""
    M, K = x.shape
    Kw, Np = w_pad.shape
    assert Kw == K
    budget, vmem_limit = _vmem_budget_and_limit()
    # f32 input (2 bufs) + on-chip bf16 copy + f32 output (2 bufs), per row.
    per_row = 2 * K * 4 + K * 2 + 2 * Np * 4
    resident = 2 * (K * Np * 2 + Np * 4)        # conservative 2x for resident blocks
    tm = _pick_row_tile(M, per_row, resident, budget)
    grid_m = pl.cdiv(M, tm)

    flops = 2 * M * K * Np
    bytes_accessed = M * K * 4 + K * Np * 2 + Np * 4 + M * Np * 4

    out = pl.pallas_call(
        _row_matmul_bias_kernel,
        out_shape=jax.ShapeDtypeStruct((M, Np), jnp.float32),
        grid_spec=pltpu.PrefetchScalarGridSpec(
            num_scalar_prefetch=0,
            grid=(grid_m,),
            in_specs=[
                pl.BlockSpec((tm, K), lambda i: (i, 0)),   # streamed f32 rows
                pl.BlockSpec((K, Np), lambda i: (0, 0)),   # resident weights
                pl.BlockSpec((1, Np), lambda i: (0, 0)),   # resident bias
            ],
            out_specs=pl.BlockSpec((tm, Np), lambda i: (i, 0)),
        ),
        compiler_params=pltpu.CompilerParams(
            dimension_semantics=("parallel",),
            vmem_limit_bytes=vmem_limit),
        cost_estimate=pl.CostEstimate(
            flops=flops, transcendentals=0, bytes_accessed=bytes_accessed),
    )(x, w_pad, b_pad)
    return out if Np == n_out else out[:, :n_out]


def fc_head(x, w1_pad, b1_pad, w2_pad, b2_pad, *, n_out, k_tile=None):
    """x: (M, K) f32; w1_pad: (Kp, Hp) bf16; w2_pad: (Hp, Pp) bf16; biases f32.
    k_tile=None keeps W1 resident; otherwise the first matmul is K-tiled."""
    M, K = x.shape
    Kp, Hp = w1_pad.shape
    _, Pp = w2_pad.shape
    budget, vmem_limit = _vmem_budget_and_limit()

    if k_tile is None:
        assert Kp == K
        # includes the (tm, Hp) f32 hidden tile and its bf16 copy in the budget
        per_row = 2 * K * 4 + K * 2 + Hp * 6 + 2 * Pp * 4
        resident = 2 * (K * Hp * 2 + Hp * 4 + Hp * Pp * 2 + Pp * 4)
        tm = _pick_row_tile(M, per_row, resident, budget)
        grid_m = pl.cdiv(M, tm)

        flops = 2 * M * K * Hp + 2 * M * Hp * Pp
        bytes_accessed = (M * K * 4 + K * Hp * 2 + Hp * Pp * 2
                          + (Hp + Pp) * 4 + M * Pp * 4)

        out = pl.pallas_call(
            _fc_resident_kernel,
            out_shape=jax.ShapeDtypeStruct((M, Pp), jnp.float32),
            grid_spec=pltpu.PrefetchScalarGridSpec(
                num_scalar_prefetch=0,
                grid=(grid_m,),
                in_specs=[
                    pl.BlockSpec((tm, K), lambda i: (i, 0)),   # streamed rows
                    pl.BlockSpec((K, Hp), lambda i: (0, 0)),   # resident W1
                    pl.BlockSpec((1, Hp), lambda i: (0, 0)),   # resident b1
                    pl.BlockSpec((Hp, Pp), lambda i: (0, 0)),  # resident W2
                    pl.BlockSpec((1, Pp), lambda i: (0, 0)),   # resident b2
                ],
                out_specs=pl.BlockSpec((tm, Pp), lambda i: (i, 0)),
            ),
            compiler_params=pltpu.CompilerParams(
                dimension_semantics=("parallel",),
                vmem_limit_bytes=vmem_limit),
            cost_estimate=pl.CostEstimate(
                flops=flops, transcendentals=0, bytes_accessed=bytes_accessed),
        )(x, w1_pad, b1_pad, w2_pad, b2_pad)
    else:
        # Large in_f: W1 cannot stay resident under v7x's 64 MiB VMEM -> K-tiled
        # reduction.  x's K zero-padding matches W1's zero-padded K rows.
        if K != Kp:
            x = jnp.pad(x, ((0, 0), (0, Kp - K)))
        grid_k = Kp // k_tile
        per_row = 2 * k_tile * 4 + k_tile * 2 + Hp * 4 + Hp * 6 + 2 * Pp * 4
        resident = 2 * (k_tile * Hp * 2 + Hp * 4 + Hp * Pp * 2 + Pp * 4)
        tm = _pick_row_tile(M, per_row, resident, budget)
        grid_m = pl.cdiv(M, tm)

        flops = 2 * M * Kp * Hp + 2 * M * Hp * Pp
        bytes_accessed = (M * Kp * 4 + Kp * Hp * 2 + Hp * Pp * 2
                          + (Hp + Pp) * 4 + M * Pp * 4)

        out = pl.pallas_call(
            _fc_ktiled_kernel,
            out_shape=jax.ShapeDtypeStruct((M, Pp), jnp.float32),
            grid_spec=pltpu.PrefetchScalarGridSpec(
                num_scalar_prefetch=0,
                grid=(grid_m, grid_k),
                in_specs=[
                    pl.BlockSpec((tm, k_tile), lambda i, k: (i, k)),
                    pl.BlockSpec((k_tile, Hp), lambda i, k: (k, 0)),
                    pl.BlockSpec((1, Hp), lambda i, k: (0, 0)),
                    pl.BlockSpec((Hp, Pp), lambda i, k: (0, 0)),
                    pl.BlockSpec((1, Pp), lambda i, k: (0, 0)),
                ],
                out_specs=pl.BlockSpec((tm, Pp), lambda i, k: (i, 0)),
                scratch_shapes=[pltpu.VMEM((tm, Hp), jnp.float32)],
            ),
            compiler_params=pltpu.CompilerParams(
                dimension_semantics=("parallel", "arbitrary"),
                vmem_limit_bytes=vmem_limit),
            cost_estimate=pl.CostEstimate(
                flops=flops, transcendentals=0, bytes_accessed=bytes_accessed),
        )(x, w1_pad, b1_pad, w2_pad, b2_pad)

    return out if Pp == n_out else out[:, :n_out]


# --------------------- octonion multiplication table ------------------------
# _OCT[i][j] = (sign, k) with  e_i * e_j = sign * e_k   (standard Cayley table)
_OCT = [
    [(+1, 0), (+1, 1), (+1, 2), (+1, 3), (+1, 4), (+1, 5), (+1, 6), (+1, 7)],
    [(+1, 1), (-1, 0), (+1, 3), (-1, 2), (+1, 5), (-1, 4), (-1, 7), (+1, 6)],
    [(+1, 2), (-1, 3), (-1, 0), (+1, 1), (+1, 6), (+1, 7), (-1, 4), (-1, 5)],
    [(+1, 3), (+1, 2), (-1, 1), (-1, 0), (+1, 7), (-1, 6), (+1, 5), (-1, 4)],
    [(+1, 4), (-1, 5), (-1, 6), (-1, 7), (-1, 0), (+1, 1), (+1, 2), (+1, 3)],
    [(+1, 5), (+1, 4), (-1, 7), (+1, 6), (-1, 1), (-1, 0), (-1, 3), (+1, 2)],
    [(+1, 6), (+1, 7), (+1, 4), (-1, 5), (-1, 2), (+1, 3), (-1, 0), (-1, 1)],
    [(+1, 7), (-1, 6), (+1, 5), (+1, 4), (-1, 3), (-1, 2), (+1, 1), (-1, 0)],
]


# --------------------------------- model -------------------------------------

class OctonionMLPModel:
    """JAX/Pallas re-implementation of models/OctonionMLP.Model with
    HyperComplexMode='OctMLP' (4 STFT windows -> 8 real octonion components)
    and TopM=0 (no top-M frequency selection)."""

    def __init__(self, key, *, embed_size, hidden_size, pred_len, enc_in, seq_len,
                 scale=0.02):
        self.embed_size = embed_size
        self.hidden_size = hidden_size
        self.pred_len = pred_len
        self.enc_in = enc_in
        self.seq_len = seq_len
        self.number_of_windows = 4  # OctMLP
        self.window_size = 2 * seq_len // (self.number_of_windows + 1)
        self.hop = self.window_size // 2
        self.loss = int(seq_len - (2 * self.hop + self.hop * (self.number_of_windows - 1)))

        E = embed_size
        k = jax.random.split(key, 7)
        # nn.Parameter(torch.randn(1, embed_size))
        self.embeddings = jax.random.normal(k[0], (1, E), jnp.float32)
        # TODO(synk): OctMLP class body is not in the reference snippet; implemented as an
        # octonion (Cayley) Hamilton-product linear layer with scale*randn weights/bias.
        self.oct_w = scale * jax.random.normal(k[1], (8, E, E), jnp.float32)
        self.oct_b = scale * jax.random.normal(k[2], (8, E), jnp.float32)
        # fc = Linear((seq_len-loss)*E, hidden) -> LeakyReLU -> Linear(hidden, pred_len)
        in_f = (seq_len - self.loss) * E
        self.fc_w1 = jax.random.normal(k[3], (in_f, hidden_size), jnp.float32) / jnp.sqrt(in_f)
        self.fc_b1 = jax.random.normal(k[4], (hidden_size,), jnp.float32) / jnp.sqrt(in_f)
        self.fc_w2 = jax.random.normal(k[5], (hidden_size, pred_len), jnp.float32) / jnp.sqrt(hidden_size)
        self.fc_b2 = jax.random.normal(k[6], (pred_len,), jnp.float32) / jnp.sqrt(hidden_size)

        # Fold the octonion multiplication structure into one (8E, 8E) block matrix so
        # the whole hypercomplex MLP is a single MXU matmul inside the Pallas kernel.
        wbig = jnp.zeros((8 * E, 8 * E), jnp.float32)
        for i in range(8):
            for j in range(8):
                s, kk = _OCT[i][j]
                wbig = wbig.at[i * E:(i + 1) * E, kk * E:(kk + 1) * E].add(s * self.oct_w[j])
        self.w_big = wbig

        # ---- pre-padded, lane-dense bf16 weights for Pallas -------------------
        # K (contraction) dims stay unpadded: the activation BlockSpec uses the full
        # K extent, so no activation padding pass is needed in the wrapper.
        K8 = 8 * E
        Np = _round_up(K8, 128)
        self.w_big_pad = jnp.pad(wbig.astype(jnp.bfloat16), ((0, 0), (0, Np - K8)))
        self.oct_b_pad = jnp.pad(self.oct_b.reshape(1, K8), ((0, 0), (0, Np - K8)))

        Hf = _round_up(hidden_size, 128)
        Pf = _round_up(pred_len, 128)
        # W1 stays resident in VMEM only while small; otherwise K-tile it so the fc
        # kernel fits v7x's 64 MiB VMEM and leaves v5e/v6e headroom for big row tiles.
        self.fc_k_tile = None if in_f * Hf * 2 <= 16 * 1024 * 1024 else 512
        kf = in_f if self.fc_k_tile is None else _round_up(in_f, self.fc_k_tile)
        self.fc_w1_pad = jnp.pad(self.fc_w1.astype(jnp.bfloat16),
                                 ((0, kf - in_f), (0, Hf - hidden_size)))
        self.fc_b1_pad = jnp.pad(self.fc_b1.reshape(1, -1), ((0, 0), (0, Hf - hidden_size)))
        self.fc_w2_pad = jnp.pad(self.fc_w2.astype(jnp.bfloat16),
                                 ((0, Hf - hidden_size), (0, Pf - pred_len)))
        self.fc_b2_pad = jnp.pad(self.fc_b2.reshape(1, -1), ((0, 0), (0, Pf - pred_len)))

    def __call__(self, x, *, use_pallas=None):
        B, T, N = x.shape
        E = self.embed_size
        C, ws, hop = self.number_of_windows, self.window_size, self.hop

        # tokenEmb: (B,T,N) -> (B,N,T,1) * (1,E) -> (B,N,T,E)
        xe = jnp.transpose(x, (0, 2, 1))[..., None] * self.embeddings

        # SFT1: split seq axis into C overlapping windows, rfft each along window axis
        windows = [xe[:, :, s:s + ws, :] for s in range(0, C * hop, hop)]
        xf = jnp.stack([jnp.fft.rfft(w, axis=-2) for w in windows], axis=2)  # (B,N,C,F,E)
        F = xf.shape[3]

        if use_pallas is None:
            # Below a few thousand rows, pallas_call fixed overhead dominates: let
            # XLA's fused dot handle it.  (The demo forces use_pallas=True.)
            use_pallas = (B * N * F) >= 4096

        # TODO(synk): TopM!=0 path (topk / gather / scatter frequency selection) not
        # implemented; this model instance uses TopM=0 which skips it.

        # OctMLP: 8 real components = interleaved (Re, Im) of the 4 windows.
        comps = []
        for c in range(C):
            comps.append(jnp.real(xf[:, :, c]))
            comps.append(jnp.imag(xf[:, :, c]))
        xc = jnp.stack(comps, axis=-2)                               # (B,N,F,8,E) f32
        x2d = xc.reshape(B * N * F, 8 * E)

        if use_pallas:
            y2d = oct_matmul(x2d, self.w_big_pad, self.oct_b_pad, n_out=8 * E)
        else:  # pure-JAX f32 reference path
            y2d = x2d @ self.w_big + self.oct_b.reshape(-1)

        yc = y2d.reshape(B, N, F, 8, E)
        yf = jnp.stack(
            [yc[:, :, :, 2 * c, :] + 1j * yc[:, :, :, 2 * c + 1, :] for c in range(C)],
            axis=2,
        )                                                            # (B,N,C,F,E) complex

        # ISFT1: irfft each window and overlap-average reconstruction along seq axis
        iw = jnp.fft.irfft(yf, n=ws, axis=-2)                        # (B,N,C,ws,E)
        half = ws // 2
        rec = [iw[:, :, 0, :half, :]]
        for i in range(1, C):
            rec.append((iw[:, :, i, :half, :] + iw[:, :, i - 1, half:, :]) / 2.0)
        rec.append(iw[:, :, C - 1, half:, :])
        xr = jnp.concatenate(rec, axis=-2)                           # (B,N,seq_len-loss,E)

        # fc head: (B, N, (seq-loss)*E) -> (B, N, pred_len) -> permute(0,2,1)
        flat = xr.reshape(B * N, -1)
        if use_pallas:
            out = fc_head(flat, self.fc_w1_pad, self.fc_b1_pad,
                          self.fc_w2_pad, self.fc_b2_pad,
                          n_out=self.pred_len, k_tile=self.fc_k_tile)
        else:  # pure-JAX f32 reference path
            h = flat @ self.fc_w1 + self.fc_b1
            h = jnp.where(h > 0, h, 0.01 * h)
            out = h @ self.fc_w2 + self.fc_b2
        out = out.reshape(B, N, self.pred_len)
        return jnp.transpose(out, (0, 2, 1))                         # (B, pred_len, N)


if __name__ == "__main__":
    # Small config consistent with the module:
    #   enc_in=4, seq_len=20 (-> window_size=8, hop=4, loss=0), embed_size=16,
    #   hidden_size=64, pred_len=8, TopM=0, HyperComplexMode='OctMLP'
    key = jax.random.PRNGKey(0)
    k_param, k_x = jax.random.split(key)

    model = OctonionMLPModel(
        k_param,
        embed_size=16,
        hidden_size=64,
        pred_len=8,
        enc_in=4,
        seq_len=20,
    )

    x = jax.random.normal(k_x, (2, 20, 4), jnp.float32)   # (B, T, N)

    out = jax.block_until_ready(model(x, use_pallas=True))    # exercises both kernels
    ref = jax.block_until_ready(model(x, use_pallas=False))   # pure-JAX f32 reference

    assert out.shape == (2, 8, 4), out.shape
    assert bool(jnp.all(jnp.isfinite(out)))
    # bf16-streamed MXU with f32 accumulation vs full-f32 reference: loose tolerance.
    max_err = float(jnp.max(jnp.abs(out - ref)))
    assert bool(jnp.allclose(out, ref, atol=5e-2, rtol=5e-2)), max_err
    print("KERNEL_OK")
</pallas_src>

<mosaic_0001>
module attributes {stable_mosaic.version = 11 : i64} {
  func.func @_row_matmul_bias_kernel(%arg0: i32, %arg1: memref<24x128xf32, #tpu.memory_space<vmem>>, %arg2: memref<128x128xbf16, #tpu.memory_space<vmem>>, %arg3: memref<1x128xf32, #tpu.memory_space<vmem>>, %arg4: memref<24x128xf32, #tpu.memory_space<vmem>>) attributes {dimension_semantics = [#tpu.dimension_semantics<parallel>], iteration_bounds = array<i64: 2>, scalar_prefetch = 0 : i64, scratch_operands = 0 : i64, tpu.core_type = #tpu.core_type<tc>, window_params = [{transform_indices = @transform_0, window_bounds = array<i64: 24, 128>}, {pipeline_mode = #tpu.pipeline_mode<synchronous>, transform_indices = @transform_1, window_bounds = array<i64: 128, 128>}, {pipeline_mode = #tpu.pipeline_mode<synchronous>, transform_indices = @transform_2, window_bounds = array<i64: 1, 128>}, {transform_indices = @transform_3, window_bounds = array<i64: 24, 128>}]} {
    %c0 = arith.constant 0 : index
    %c0_0 = arith.constant 0 : index
    %0 = vector.load %arg1[%c0, %c0_0] : memref<24x128xf32, #tpu.memory_space<vmem>>, vector<24x128xf32>
    %1 = arith.truncf %0 : vector<24x128xf32> to vector<24x128xbf16>
    %c0_1 = arith.constant 0 : index
    %c0_2 = arith.constant 0 : index
    %2 = vector.load %arg2[%c0_1, %c0_2] : memref<128x128xbf16, #tpu.memory_space<vmem>>, vector<128x128xbf16>
    %cst = arith.constant dense<0.000000e+00> : vector<24x128xf32>
    %3 = tpu.matmul %1, %2, %cst {dimension_numbers = #tpu.dot_dimension_numbers<[1], [0], [0], [1], [0, 0, 1, 1], [], []>} : vector<24x128xbf16>, vector<128x128xbf16>, vector<24x128xf32> -> vector<24x128xf32>
    %c0_3 = arith.constant 0 : index
    %c0_4 = arith.constant 0 : index
    %4 = vector.load %arg3[%c0_3, %c0_4] : memref<1x128xf32, #tpu.memory_space<vmem>>, vector<1x128xf32>
    %5 = vector.broadcast %4 : vector<1x128xf32> to vector<24x128xf32>
    %6 = arith.addf %3, %5 : vector<24x128xf32>
    %c0_5 = arith.constant 0 : index
    %c0_6 = arith.constant 0 : index
    %7 = vector.load %arg4[%c0_5, %c0_6] : memref<24x128xf32, #tpu.memory_space<vmem>>, vector<24x128xf32>
    tpu.vector_store %arg4[%c0_5, %c0_6], %6 {strides = array<i32>} : memref<24x128xf32, #tpu.memory_space<vmem>>, vector<24x128xf32>,
    return
  }
  func.func @transform_0(%arg0: i32) -> (i32, i32) {
    %c0_i32 = arith.constant 0 : i32
    %c0_i32_0 = arith.constant 0 : i32
    return %arg0, %c0_i32 : i32, i32
  }
  func.func @transform_1(%arg0: i32) -> (i32, i32) {
    %c0_i32 = arith.constant 0 : i32
    %c0_i32_0 = arith.constant 0 : i32
    %c0_i32_1 = arith.constant 0 : i32
    return %c0_i32, %c0_i32_0 : i32, i32
  }
  func.func @transform_2(%arg0: i32) -> (i32, i32) {
    %c0_i32 = arith.constant 0 : i32
    %c0_i32_0 = arith.constant 0 : i32
    %c0_i32_1 = arith.constant 0 : i32
    return %c0_i32, %c0_i32_0 : i32, i32
  }
  func.func @transform_3(%arg0: i32) -> (i32, i32) {
    %c0_i32 = arith.constant 0 : i32
    %c0_i32_0 = arith.constant 0 : i32
    return %arg0, %c0_i32 : i32, i32
  }
}

</mosaic_0001>

<llo_original>
// kernel: tpu_custom_call.1
$region0: #{tpu_custom_call.1}
  #allocation0 [shape = 'u32[]', space=smem, size = 0x4, offset = 0x4, fixed_abs, tag = 'smem constant byte address 0x4 - core index']
  #allocation1 [shape = 'u32[144,128]{1,0:T(1,128)}', space=vmem, size = 0x12000, scoped, tag = 'internal scratch']
  %s0 = inlined_call_operand.hbm [shape: f32[40,128], index: 0, kind: input, shape index: {}]
  %s1 = inlined_call_operand.hbm [shape: bf16[128,128], index: 1, kind: input, shape index: {}]
  %s2 = inlined_call_operand.vmem [shape: f32[1,128], index: 2, kind: input, shape index: {}]
  %s3 = inlined_call_operand.hbm [shape: f32[40,128], index: 3, kind: output, shape index: {}]
  %s4 = sld [smem:[#allocation0]]
  $region53: #{tpu_custom_call.1} parent=0
    _
  %s6 = ssub.s32 1, %s4
  %s7 = scalar_select 0, %s6, %s4
  $region1: #{tpu_custom_call.1} parent=0
    #allocation2 [shape = 'u8[24576]{0}', space=vmem, size = 0x6000, scoped, tag = 'input window, operand 0']
    #allocation3 [shape = 's32[2]{0}', space=sflag, size = 0x8, scoped, tag = 'scoped memory for tpu_custom_call.1']
    #allocation4 [shape = 's32[2]{0}', space=sflag, size = 0x8, scoped, tag = 'scoped memory for tpu_custom_call.1']
    #allocation5 [shape = 'u8[32768]{0}', space=vmem, size = 0x8000, scoped, tag = 'input window, operand 1, single buffered']
    #allocation6 [shape = 's32[1]{0}', space=sflag, size = 0x4, scoped, tag = 'scoped memory for tpu_custom_call.1']
    #allocation7 [shape = 'u8[24576]{0}', space=vmem, size = 0x6000, scoped, tag = 'output window, operand 0']
    %8 = vsyncpa [#allocation3], 0
    %s9 = scalar_lea.sflag [#allocation3], 1
    %10 = vsyncpa %s9, 0
    %11 = vsyncpa [#allocation6], 0
    %12 = vsyncpa [#allocation4], 0
    %s13 = scalar_lea.sflag [#allocation4], 1
    %14 = vsyncpa %s13, 0
    loop: start=0, step=1, limit=4
    $region2: #{tpu_custom_call.1} parent=1 // loop_pre_header
      _
    $region3: #{tpu_custom_call.1} parent=1 // loop_header
      %s16 = sphi 0, %s20
      %p17 = scmp.ge.s32.totalorder %s16, 4
      %s26 = sphi 0, %s28
      %s29 = sphi 0, %s26
      %s30 = sphi 0, %s29
      %s46 = sphi 0, %s30
      %s50 = sphi 0, %s50
      %s52 = sphi 0, %s50
      %s53 = sphi 0, %s52
      %s67 = sphi 0, %s53
      %s71 = sphi 0, %s71
      %s73 = sphi 0, %s71
      %s74 = sphi 0, %s73
      %s88 = sphi 0, %s74
      %s94 = sphi 0, %s96
      %s97 = sphi 0, %s94
      %s98 = sphi 0, %s97
      %s114 = sphi 0, %s98
    $region4: #{tpu_custom_call.1} parent=1 // loop_header_branch
      %19 = sbr.rel (%p17) target = $region8
    $region5: #{tpu_custom_call.1} parent=1 // loop_body
      %s21 = ssub.s32 %s16, 1
      %s22 = ssub.s32 %s16, 2
      %s23 = sadd.s32 %s16, 1
      %s24 = ssub.s32 %s16, %s23
      %p25 = scmp.eq.s32.totalorder %s24, 0
      %s27 = sadd.s32 %s26, 1
      %s28 = scalar_select %p25, %s26, %s27
      %p31 = pneg %p25
      %p32 = scmp.eq.s32.totalorder %s16, 1
      %p33 = por %p31, %p32
      %p34 = scmp.ne.s32.totalorder %s26, %s29
      %p35 = scmp.eq.s32.totalorder %s16, 0
      %p36 = por %p34, %p35
      %p37 = scmp.ne.s32.totalorder %s26, %s29
      %p38 = scmp.eq.s32.totalorder %s21, 1
      %p39 = por %p37, %p38
      %p40 = scmp.ne.s32.totalorder %s29, %s30
      %p41 = scmp.eq.s32.totalorder %s21, 0
      %p42 = por %p40, %p41
      %p43 = scmp.ne.s32.totalorder %s29, %s30
      %p44 = scmp.eq.s32.totalorder %s22, 1
      %p45 = por %p43, %p44
      %p47 = scmp.ne.s32.totalorder %s30, %s46
      %p48 = scmp.eq.s32.totalorder %s22, 0
      %p49 = por %p47, %p48
      %s51 = sadd.s32 %s50, 1
      %p54 = scmp.eq.s32.totalorder %s16, 1
      %p55 = scmp.ne.s32.totalorder %s50, %s52
      %p56 = scmp.eq.s32.totalorder %s16, 0
      %p57 = por %p55, %p56
      %p58 = scmp.ne.s32.totalorder %s50, %s52
      %p59 = scmp.eq.s32.totalorder %s21, 1
      %p60 = por %p58, %p59
      %p61 = scmp.ne.s32.totalorder %s52, %s53
      %p62 = scmp.eq.s32.totalorder %s21, 0
      %p63 = por %p61, %p62
      %p64 = scmp.ne.s32.totalorder %s52, %s53
      %p65 = scmp.eq.s32.totalorder %s22, 1
      %p66 = por %p64, %p65
      %p68 = scmp.ne.s32.totalorder %s53, %s67
      %p69 = scmp.eq.s32.totalorder %s22, 0
      %p70 = por %p68, %p69
      %s72 = sadd.s32 %s71, 1
      %p75 = scmp.eq.s32.totalorder %s16, 1
      %p76 = scmp.ne.s32.totalorder %s71, %s73
      %p77 = scmp.eq.s32.totalorder %s16, 0
      %p78 = por %p76, %p77
      %p79 = scmp.ne.s32.totalorder %s71, %s73
      %p80 = scmp.eq.s32.totalorder %s21, 1
      %p81 = por %p79, %p80
      %p82 = scmp.ne.s32.totalorder %s73, %s74
      %p83 = scmp.eq.s32.totalorder %s21, 0
      %p84 = por %p82, %p83
      %p85 = scmp.ne.s32.totalorder %s73, %s74
      %p86 = scmp.eq.s32.totalorder %s22, 1
      %p87 = por %p85, %p86
      %p89 = scmp.ne.s32.totalorder %s74, %s88
      %p90 = scmp.eq.s32.totalorder %s22, 0
      %p91 = por %p89, %p90
      %s92 = ssub.s32 %s16, %s23
      %p93 = scmp.eq.s32.totalorder %s92, 0
      %s95 = sadd.s32 %s94, 1
      %s96 = scalar_select %p93, %s94, %s95
      %p99 = pneg %p93
      %p100 = scmp.eq.s32.totalorder %s16, 1
      %p101 = por %p99, %p100
      %p102 = scmp.ne.s32.totalorder %s94, %s97
      %p103 = scmp.eq.s32.totalorder %s16, 0
      %p104 = por %p102, %p103
      %p105 = scmp.ne.s32.totalorder %s94, %s97
      %p106 = scmp.eq.s32.totalorder %s21, 1
      %p107 = por %p105, %p106
      %p108 = scmp.ne.s32.totalorder %s97, %s98
      %p109 = scmp.eq.s32.totalorder %s21, 0
      %p110 = por %p108, %p109
      %p111 = scmp.ne.s32.totalorder %s97, %s98
      %p112 = scmp.eq.s32.totalorder %s22, 1
      %p113 = por %p111, %p112
      %p115 = scmp.ne.s32.totalorder %s98, %s114
      %p116 = scmp.eq.s32.totalorder %s22, 0
      %p117 = por %p115, %p116
      %p118 = scmp.le.s32.totalorder 1, %s16
      %p119 = scmp.lt.s32.totalorder %s16, 3
      %p120 = pnand %p118, %p119
      %p121 = pneg %p120
      // Predicated region
      $region9: #{tpu_custom_call.1} parent=5 // pred_check
        _
      $region10: #{tpu_custom_call.1} parent=5 // pred_check_branch
        %123 = sbr.rel (%p120) target = $region12
      $region11: #{tpu_custom_call.1} parent=5 // pred_region
        %s124 = ssub.s32 %s16, 1
        // Predicated region
        $region13: #{tpu_custom_call.1} parent=11 // pred_check
          %p125 = pneg %p63
        $region14: #{tpu_custom_call.1} parent=11 // pred_check_branch
          %127 = sbr.rel (%p125) target = $region16
        $region15: #{tpu_custom_call.1} parent=11 // pred_region
          %s129 = ssub.s32 1024, 1024
          %130 = vsyncadd [#allocation6], %s129
          %s131 = sshll.u32 [#allocation5], 4
          %s132 = int_to_ptr.vmem [resolvable:$true] %s131
          %137 = dma.hbm_to_vmem [thread:$0]  %s1, 1024, %s132, [#allocation6], 64, 64, 4
        $region16: #{tpu_custom_call.1} parent=11 // pred_fallthru
          _
        // Predicated region
        $region17: #{tpu_custom_call.1} parent=11 // pred_check
          %p138 = pneg %p84
        $region18: #{tpu_custom_call.1} parent=11 // pred_check_branch
          %140 = sbr.rel (%p138) target = $region20
        $region19: #{tpu_custom_call.1} parent=11 // pred_region
          _
        $region20: #{tpu_custom_call.1} parent=11 // pred_fallthru
          _
      $region12: #{tpu_custom_call.1} parent=5 // pred_fallthru
        _
      %p141 = scmp.lt.s32.totalorder %s16, 2
      // Predicated region
      $region21: #{tpu_custom_call.1} parent=5 // pred_check
        %p142 = pneg %p141
      $region22: #{tpu_custom_call.1} parent=5 // pred_check_branch
        %144 = sbr.rel (%p142) target = $region24
      $region23: #{tpu_custom_call.1} parent=5 // pred_region
        // Predicated region
        $region25: #{tpu_custom_call.1} parent=23 // pred_check
          %p145 = pneg %p36
        $region26: #{tpu_custom_call.1} parent=23 // pred_check_branch
          %147 = sbr.rel (%p145) target = $region28
        $region27: #{tpu_custom_call.1} parent=23 // pred_region
          %s148 = sand.u32 %s26, 1
          %s149 = scalar_lea.sflag [#allocation3], %s148
          %s150 = sand.u32 %s26, 1
          %s151 = smul.addr %s150, 24
          %s152 = scalar_lea.vmem [#allocation2], %s151
          %s153 = smul.u32 3, %s16
          %s154 = ssub.s32 5, %s153
          %p155 = scmp.lt.s32.totalorder %s154, 3
          %s156 = scalar_select %p155, %s154, 3
          %s157 = smul.u32 128, %s156
          %s159 = ssub.s32 384, %s157
          %160 = vsyncadd %s149, %s159
          %p161 = scmp.ne.s32.totalorder 0, %s157
          %s162 = smul.addr %s153, 128
          %s163 = scalar_lea.hbm %s0, %s162
          %s164 = smul.u32 8, %s156
          %s165 = sshll.u32 %s152, 4
          %s166 = int_to_ptr.vmem [resolvable:$true] %s165
          %s167 = sshll.u32 %s164, 4
          %171 = dma.hbm_to_vmem [thread:$0]  (%p161), %s163, %s167, %s166, %s149, 128, 128, 8
        $region28: #{tpu_custom_call.1} parent=23 // pred_fallthru
          _
      $region24: #{tpu_custom_call.1} parent=5 // pred_fallthru
        _
      %p172 = scmp.le.s32.totalorder 1, %s16
      %p173 = scmp.lt.s32.totalorder %s16, 3
      %p174 = pnand %p172, %p173
      %p175 = pneg %p174
      // Predicated region
      $region29: #{tpu_custom_call.1} parent=5 // pred_check
        _
      $region30: #{tpu_custom_call.1} parent=5 // pred_check_branch
        %177 = sbr.rel (%p174) target = $region32
      $region31: #{tpu_custom_call.1} parent=5 // pred_region
        %s178 = ssub.s32 %s16, 1
        %s179 = sand.u32 %s29, 1
        %s180 = scalar_lea.sflag [#allocation3], %s179
        %s181 = sand.u32 %s29, 1
        %s182 = smul.addr %s181, 24
        %s183 = scalar_lea.vmem [#allocation2], %s182
        // Predicated region
        $region33: #{tpu_custom_call.1} parent=31 // pred_check
          %p184 = pneg %p42
        $region34: #{tpu_custom_call.1} parent=31 // pred_check_branch
          %186 = sbr.rel (%p184) target = $region36
        $region35: #{tpu_custom_call.1} parent=31 // pred_region
          %187 = dma.done %s180, 384
        $region36: #{tpu_custom_call.1} parent=31 // pred_fallthru
          _
        // Predicated region
        $region37: #{tpu_custom_call.1} parent=31 // pred_check
          %p188 = pneg %p63
        $region38: #{tpu_custom_call.1} parent=31 // pred_check_branch
          %190 = sbr.rel (%p188) target = $region40
        $region39: #{tpu_custom_call.1} parent=31 // pred_region
          %191 = dma.done [#allocation6], 1024
        $region40: #{tpu_custom_call.1} parent=31 // pred_fallthru
          _
        %s192 = sand.u32 %s29, 1
        %s193 = scalar_lea.sflag [#allocation3], %s192
        %s194 = sand.u32 %s29, 1
        %s195 = smul.addr %s194, 24
        %s196 = scalar_lea.vmem [#allocation2], %s195
        %p197 = pneg %p42
        %p198 = pneg %p39
        %p199 = pneg %p63
        %p200 = pneg %p60
        %p201 = pneg %p84
        %p202 = pneg %p81
        %p203 = pneg %p110
        %p204 = pneg %p107
        %s205 = sand.u32 %s97, 1
        %s206 = scalar_lea.sflag [#allocation4], %s205
        %s207 = sand.u32 %s97, 1
        %s208 = smul.addr %s207, 24
        %s209 = scalar_lea.vmem [#allocation7], %s208
        %s210 = smul.u32 3, %s21
        %s211 = ssub.s32 5, %s210
        %p212 = scmp.lt.s32.totalorder %s211, 3
        %s213 = scalar_select %p212, %s211, 3
        %s214 = smul.u32 128, %s213
        %s215 = smul.u32 3, %s21
        %s216 = ssub.s32 5, %s215
        %p217 = scmp.lt.s32.totalorder %s216, 3
        %s218 = scalar_select %p217, %s216, 3
        %s219 = smul.u32 128, %s218
        %v221 = vld [vmem:[%s183] sm:$0xff]
        %v222 = vld [vmem:[%s183 + $0x8] sm:$0xff]
        %v223 = vld [vmem:[%s183 + $0x10] sm:$0xff]
        %v224 = vpack.c.bf16 %v222, %v221
        %v225 = vpack.c.bf16 %v223, %v223
        %v226 = vld [vmem:[#allocation5] sm:$0xf]
        %v227 = vld [vmem:[#allocation5 + $0x4] sm:$0xf]
        %v228 = vld [vmem:[#allocation5 + $0x8] sm:$0xf]
        %v229 = vld [vmem:[#allocation5 + $0xc] sm:$0xf]
        %v230 = vld [vmem:[#allocation5 + $0x10] sm:$0xf]
        %v231 = vld [vmem:[#allocation5 + $0x14] sm:$0xf]
        %v232 = vld [vmem:[#allocation5 + $0x18] sm:$0xf]
        %v233 = vld [vmem:[#allocation5 + $0x1c] sm:$0xf]
        %v234 = vld [vmem:[#allocation5 + $0x20] sm:$0xf]
        %v235 = vld [vmem:[#allocation5 + $0x24] sm:$0xf]
        %v236 = vld [vmem:[#allocation5 + $0x28] sm:$0xf]
        %v237 = vld [vmem:[#allocation5 + $0x2c] sm:$0xf]
        %v238 = vld [vmem:[#allocation5 + $0x30] sm:$0xf]
        %v239 = vld [vmem:[#allocation5 + $0x34] sm:$0xf]
        %v240 = vld [vmem:[#allocation5 + $0x38] sm:$0xf]
        %v241 = vld [vmem:[#allocation5 + $0x3c] sm:$0xf]
        %v242 = vld [vmem:[%s2] sm:$0x1]
        %v244 = vlaneseq
        %v245 = vshrl.u32 %v244, 7
        %v246 = vsub.s32 0, %v245
        %v247 = vrot.slane %v242, %v246
        %v265 = vunpack.c.l.b16 %v226
        %v266 = vunpack.c.l.b16 %v227
        %v267 = vunpack.c.l.b16 %v228
        %v268 = vunpack.c.l.b16 %v229
        %v269 = vunpack.c.l.b16 %v230
        %v270 = vunpack.c.l.b16 %v231
        %v271 = vunpack.c.l.b16 %v232
        %v272 = vunpack.c.l.b16 %v233
        %v273 = vunpack.c.l.b16 %v234
        %v274 = vunpack.c.l.b16 %v235
        %v275 = vunpack.c.l.b16 %v236
        %v276 = vunpack.c.l.b16 %v237
        %v277 = vunpack.c.l.b16 %v238
        %v278 = vunpack.c.l.b16 %v239
        %v279 = vunpack.c.l.b16 %v240
        %v280 = vunpack.c.l.b16 %v241
        %v281 = vpack.c.b16 %v266, %v265
        %v282 = vpack.c.b16 %v268, %v267
        %v283 = vpack.c.b16 %v270, %v269
        %v284 = vpack.c.b16 %v272, %v271
        %v285 = vpack.c.b16 %v274, %v273
        %v286 = vpack.c.b16 %v276, %v275
        %v287 = vpack.c.b16 %v278, %v277
        %v288 = vpack.c.b16 %v280, %v279
        %297 = vmatprep.subr.bf16.mxu0 0
        %298 = vmatpush1.bf16.msra.mxu0 %v288
        %299 = vmatprep.subr.bf16.mxu0 0
        %300 = vmatpush1.bf16.msra.mxu0 %v287
        %301 = vmatprep.subr.bf16.mxu0 0
        %302 = vmatpush1.bf16.msra.mxu0 %v286
        %303 = vmatprep.subr.bf16.mxu0 0
        %304 = vmatpush1.bf16.msra.mxu0 %v285
        %305 = vmatprep.subr.bf16.mxu0 0
        %306 = vmatpush1.bf16.msra.mxu0 %v284
        %307 = vmatprep.subr.bf16.mxu0 0
        %308 = vmatpush1.bf16.msra.mxu0 %v283
        %309 = vmatprep.subr.bf16.mxu0 0
        %310 = vmatpush1.bf16.msra.mxu0 %v282
        %311 = vmatprep.subr.bf16.mxu0 0
        %312 = vmatpush1.bf16.msra.mxu0 %v281
        %313 = vmatprep.subr.bf16.mxu0 0
        %314 = vmatpush2.bf16.msra.mxu0 0
        %315 = vmatprep.subr.bf16.mxu0 0
        %316 = vmatpush2.bf16.msra.mxu0 0
        %317 = vmatprep.subr.bf16.mxu0 0
        %318 = vmatpush2.bf16.msra.mxu0 0
        %319 = vmatprep.subr.bf16.mxu0 0
        %320 = vmatpush2.bf16.msra.mxu0 0
        %321 = vmatprep.subr.bf16.mxu0 0
        %322 = vmatpush2.bf16.msra.mxu0 0
        %323 = vmatprep.subr.bf16.mxu0 0
        %324 = vmatpush2.bf16.msra.mxu0 0
        %325 = vmatprep.subr.bf16.mxu0 0
        %326 = vmatpush2.bf16.msra.mxu0 0
        %327 = vmatprep.subr.bf16.mxu0 0
        %328 = vmatpush2.bf16.msra.mxu0 0
        %329 = vmatprep.mubr.bf16.mxu0 0
        %330 = vmatmul.mubr.bf16.gmra.mxu0 %v224
        %v331 = vpop.f32.mrf.mxu0
        %v332 = vadd.f32 %v247, %v331
        %v333 = vpop.f32.mrf.mxu0
        %v334 = vpop.f32.mrf.mxu0
        %v335 = vadd.f32 %v247, %v334
        %v336 = vpop.f32.mrf.mxu0
        %337 = vmatprep.mubr.bf16.mxu0 0
        %338 = vmatmul.mubr.bf16.gmra.mxu0 %v225
        %v339 = vpop.f32.mrf.mxu0
        %v340 = vadd.f32 %v247, %v339
        %v341 = vpop.f32.mrf.mxu0
        %v342 = vpop.f32.mrf.mxu0
        %v343 = vpop.f32.mrf.mxu0
        %344 = vdwg.mxu0
        %345 = vst [vmem:[%s209] sm:$0xff] %v332
        %346 = vst [vmem:[%s209 + $0x8] sm:$0xff] %v335
        %347 = vst [vmem:[%s209 + $0x10] sm:$0xff] %v340
        %s348 = sand.u32 %s97, 1
        %s349 = scalar_lea.sflag [#allocation4], %s348
        %s350 = sand.u32 %s97, 1
        %s351 = smul.addr %s350, 24
        %s352 = scalar_lea.vmem [#allocation7], %s351
        // Predicated region
        $region41: #{tpu_custom_call.1} parent=31 // pred_check
          %p353 = pneg %p107
        $region42: #{tpu_custom_call.1} parent=31 // pred_check_branch
          %355 = sbr.rel (%p353) target = $region44
        $region43: #{tpu_custom_call.1} parent=31 // pred_region
          %s356 = smul.u32 3, %s21
          %s357 = ssub.s32 5, %s356
          %p358 = scmp.lt.s32.totalorder %s357, 3
          %s359 = scalar_select %p358, %s357, 3
          %s360 = smul.u32 128, %s359
          %s362 = ssub.s32 384, %s360
          %363 = vsyncadd %s349, %s362
          %p364 = scmp.ne.s32.totalorder 0, %s360
          %s365 = smul.addr %s356, 128
          %s366 = scalar_lea.hbm %s3, %s365
          %s367 = smul.u32 8, %s359
          %s368 = sshll.u32 %s352, 4
          %s369 = int_to_ptr.vmem [resolvable:$true] %s368
          %s370 = sshll.u32 %s367, 4
          %374 = dma.vmem_to_hbm [thread:$0]  (%p364), %s369, %s370, %s366, %s349, 128, 128, 8
        $region44: #{tpu_custom_call.1} parent=31 // pred_fallthru
          _
      $region32: #{tpu_custom_call.1} parent=5 // pred_fallthru
        _
      %p375 = scmp.le.s32.totalorder 2, %s16
      // Predicated region
      $region45: #{tpu_custom_call.1} parent=5 // pred_check
        %p376 = pneg %p375
      $region46: #{tpu_custom_call.1} parent=5 // pred_check_branch
        %378 = sbr.rel (%p376) target = $region48
      $region47: #{tpu_custom_call.1} parent=5 // pred_region
        %s379 = ssub.s32 %s16, 2
        // Predicated region
        $region49: #{tpu_custom_call.1} parent=47 // pred_check
          %p380 = pneg %p113
        $region50: #{tpu_custom_call.1} parent=47 // pred_check_branch
          %382 = sbr.rel (%p380) target = $region52
        $region51: #{tpu_custom_call.1} parent=47 // pred_region
          %s383 = sand.u32 %s98, 1
          %s384 = scalar_lea.sflag [#allocation4], %s383
          %s385 = sand.u32 %s98, 1
          %s386 = smul.addr %s385, 24
          %s387 = scalar_lea.vmem [#allocation7], %s386
          %388 = dma.done %s384, 384
        $region52: #{tpu_custom_call.1} parent=47 // pred_fallthru
          _
      $region48: #{tpu_custom_call.1} parent=5 // pred_fallthru
        _
    $region6: #{tpu_custom_call.1} parent=1 // loop_footer
      %s20 = sadd.s32 1, %s16
    $region7: #{tpu_custom_call.1} parent=1 // loop_footer_branch
      %15 = sbr.rel target = $region3
    $region8: #{tpu_custom_call.1} parent=1 // loop_exit
      _
    %389 = vsyncpa [#allocation3], 1
    %s390 = scalar_lea.sflag [#allocation3], 1
    %391 = vsyncpa %s390, 1
    %392 = vsyncpa [#allocation6], 1
    %393 = vsyncpa [#allocation4], 1
    %s394 = scalar_lea.sflag [#allocation4], 1
    %395 = vsyncpa %s394, 1

</llo_original>
